<compile_context>
chip_gen: v7x
topology: tpu7x:2x2x1
jax: 0.10.0
libtpu: 0.0.40
codegen_flags: <defaults>
</compile_context>

<pallas_src>
import jax
import jax.numpy as jnp
from jax.experimental import pallas as pl
from jax.experimental.pallas import tpu as pltpu

LANE = 128      # vreg lane width
SUBLANE = 16    # bf16 sublane packing (also a multiple of the f32 sublane of 8)


def _round_up(x, m):
    return ((x + m - 1) // m) * m


def _make_dqn_kernel(num_layers, state_size, out_pads):
    """Fused forward kernel for `num_layers` Linear layers with ReLU between."""

    def kernel(*refs):
        x_ref = refs[0]                               # (tile_m, state_size) f32
        w_refs = refs[1:1 + num_layers]               # bf16 (in_pad, out_pad)
        b_ref = refs[1 + num_layers]                  # (num_layers, bmax) f32
        out_ref = refs[2 + num_layers]                # (tile_m, out_pads[-1]) bf16
        xpad_ref = refs[3 + num_layers]               # VMEM (tile_m, in_pads[0]) bf16

        # Widen un-padded x to a lane-dense 128-wide bf16 tile.  Zero-fill every
        # grid step so padded lanes are guaranteed zero on every core.
        xpad_ref[...] = jnp.zeros_like(xpad_ref)
        xpad_ref[:, 0:state_size] = x_ref[...].astype(xpad_ref.dtype)
        h = xpad_ref[...]

        for l in range(num_layers):
            w = w_refs[l][...]
            b = b_ref[l:l + 1, 0:out_pads[l]]                       # (1, out_pad) f32
            acc = jnp.dot(h, w, preferred_element_type=jnp.float32) + b
            if l < num_layers - 1:
                # ReLU on the f32 accumulator, downcast for the next MXU pass.
                h = jnp.maximum(acc, 0.0).astype(w.dtype)
            else:
                out_ref[...] = acc.astype(out_ref.dtype)

    return kernel


def prepare_dqn_params(params, compute_dtype=jnp.bfloat16):
    """One-time (per parameter update) padding + cast of the DQN parameters.

    params: list of (W, b): W (in, out) f32 (transpose of nn.Linear.weight), b (1, out) f32
    Returns a dict of padded bf16 weights, a concatenated f32 bias matrix, and metadata.
    """
    dims = tuple((int(w.shape[0]), int(w.shape[1])) for w, _ in params)
    in_pads = tuple(_round_up(d[0], LANE) for d in dims)
    out_pads = tuple(_round_up(d[1], LANE) for d in dims)
    bmax = max(out_pads)

    weights = []
    for (w, _), ip, op in zip(params, in_pads, out_pads):
        w_p = jnp.zeros((ip, op), compute_dtype)
        w_p = w_p.at[: w.shape[0], : w.shape[1]].set(w.astype(compute_dtype))
        weights.append(w_p)

    b_cat = jnp.zeros((len(params), bmax), jnp.float32)
    for l, (_, b) in enumerate(params):
        b_cat = b_cat.at[l, : b.shape[-1]].set(b.reshape(-1).astype(jnp.float32))

    return {"weights": tuple(weights), "bias": b_cat, "dims": dims,
            "in_pads": in_pads, "out_pads": out_pads}


def dqn_forward(x, prepped, *, tile_m=1024, out_dtype=jnp.bfloat16):
    """Fused DQN forward pass.

    x: [batch, state_size] float32 (un-padded, un-cast)
    prepped: output of prepare_dqn_params
    returns: [batch, action_size] float32
    """
    weights = prepped["weights"]
    b_cat = prepped["bias"]
    dims = prepped["dims"]
    in_pads = prepped["in_pads"]
    out_pads = prepped["out_pads"]
    num_layers = len(weights)
    compute_dtype = weights[0].dtype

    batch, state_size = x.shape
    assert state_size == dims[0][0], "x feature dim does not match params"
    action_size = dims[-1][1]

    # Batch tiling: big tiles to amortize the ~0.35us per-step overhead, but at
    # least 2 grid steps once the batch is large enough so the "parallel" axis
    # splits across both TensorCores on v7x (no effect on v5e/v6e).
    tile_m = max(SUBLANE, _round_up(tile_m, SUBLANE))
    min_padded = _round_up(batch, SUBLANE)
    if min_padded >= 2 * SUBLANE:
        tile_cap = _round_up((min_padded + 1) // 2, SUBLANE)
    else:
        tile_cap = min_padded
    tile_m = min(tile_m, tile_cap)
    padded_batch = _round_up(batch, tile_m)
    grid = (padded_batch // tile_m,)

    # Only tiny row padding when needed; the feature dim stays natural-width.
    x_in = x if padded_batch == batch else jnp.pad(x, ((0, padded_batch - batch), (0, 0)))

    in_specs = [pl.BlockSpec((tile_m, state_size), lambda i: (i, 0))]
    for l in range(num_layers):
        # Constant index_map -> weights stay VMEM resident across grid steps.
        in_specs.append(pl.BlockSpec((in_pads[l], out_pads[l]), lambda i: (0, 0)))
    in_specs.append(pl.BlockSpec((num_layers, b_cat.shape[1]), lambda i: (0, 0)))
    out_specs = pl.BlockSpec((tile_m, out_pads[-1]), lambda i: (i, 0))

    flops = 2 * padded_batch * sum(ip * op for ip, op in zip(in_pads, out_pads))
    bytes_accessed = int(x_in.size) * x_in.dtype.itemsize
    bytes_accessed += sum(int(w.size) * w.dtype.itemsize for w in weights)
    bytes_accessed += int(b_cat.size) * 4
    bytes_accessed += padded_batch * out_pads[-1] * jnp.dtype(out_dtype).itemsize
    cost = pl.CostEstimate(flops=flops, transcendentals=0,
                           bytes_accessed=bytes_accessed)

    out_padded = pl.pallas_call(
        _make_dqn_kernel(num_layers, state_size, out_pads),
        out_shape=jax.ShapeDtypeStruct((padded_batch, out_pads[-1]), out_dtype),
        grid=grid,
        in_specs=in_specs,
        out_specs=out_specs,
        scratch_shapes=[pltpu.VMEM((tile_m, in_pads[0]), compute_dtype)],
        compiler_params=pltpu.CompilerParams(
            dimension_semantics=("parallel",),
        ),
        cost_estimate=cost,
    )(x_in, *weights, b_cat)

    return out_padded[:batch, :action_size].astype(jnp.float32)


def init_dqn_params(key, state_size, action_size, hidden_layers=(64, 128, 64)):
    """Deterministic init mimicking nn.Linear's uniform(-1/sqrt(fan_in), 1/sqrt(fan_in))."""
    sizes = [state_size, *hidden_layers, action_size]
    params = []
    for i in range(len(sizes) - 1):
        fan_in, fan_out = sizes[i], sizes[i + 1]
        key, kw, kb = jax.random.split(key, 3)
        bound = 1.0 / (fan_in ** 0.5)
        w = jax.random.uniform(kw, (fan_in, fan_out), jnp.float32, -bound, bound)
        b = jax.random.uniform(kb, (1, fan_out), jnp.float32, -bound, bound)
        params.append((w, b))
    return params


def dqn_reference(x, params, compute_dtype=jnp.bfloat16, out_dtype=jnp.bfloat16):
    """Pure-JAX reference with matching bf16 storage / f32 accumulation / bf16 output."""
    h = x.astype(compute_dtype).astype(jnp.float32)
    for i, (w, b) in enumerate(params):
        wq = w.astype(compute_dtype).astype(jnp.float32)
        z = jnp.dot(h, wq, precision=jax.lax.Precision.HIGHEST) + b
        if i < len(params) - 1:
            h = jnp.maximum(z, 0.0).astype(compute_dtype).astype(jnp.float32)
        else:
            return z.astype(out_dtype).astype(jnp.float32)


if __name__ == "__main__":
    key = jax.random.PRNGKey(0)

    state_size = 8
    action_size = 4
    hidden_layers = (64, 128, 64)

    key, kx = jax.random.split(key)
    params = init_dqn_params(key, state_size, action_size, hidden_layers)
    prepped = prepare_dqn_params(params)   # one-time pad + bf16 cast

    # Small batch: single grid step.
    x_small = jax.random.normal(kx, (2, state_size), dtype=jnp.float32)
    out_small = jax.block_until_ready(dqn_forward(x_small, prepped))
    ref_small = dqn_reference(x_small, params)
    assert out_small.shape == (2, action_size)
    assert jnp.allclose(out_small, ref_small, atol=1e-2, rtol=1e-2), "mismatch (small batch)"

    # Larger batch: exercises >=2 grid steps (megacore path) and row padding.
    key, kx2 = jax.random.split(key)
    x_big = jax.random.normal(kx2, (100, state_size), dtype=jnp.float32)
    out_big = jax.block_until_ready(dqn_forward(x_big, prepped))
    ref_big = dqn_reference(x_big, params)
    assert out_big.shape == (100, action_size)
    assert jnp.allclose(out_big, ref_big, atol=1e-2, rtol=1e-2), "mismatch (large batch)"

    print("KERNEL_OK")
</pallas_src>

<mosaic_0001>
module attributes {stable_mosaic.version = 11 : i64} {
  func.func @kernel(%arg0: i32, %arg1: memref<16x8xf32, #tpu.memory_space<vmem>>, %arg2: memref<128x128xbf16, #tpu.memory_space<vmem>>, %arg3: memref<128x128xbf16, #tpu.memory_space<vmem>>, %arg4: memref<128x128xbf16, #tpu.memory_space<vmem>>, %arg5: memref<128x128xbf16, #tpu.memory_space<vmem>>, %arg6: memref<4x128xf32, #tpu.memory_space<vmem>>, %arg7: memref<16x128xbf16, #tpu.memory_space<vmem>>, %arg8: memref<16x128xbf16, #tpu.memory_space<vmem>>) attributes {dimension_semantics = [#tpu.dimension_semantics<parallel>], iteration_bounds = array<i64: 1>, scalar_prefetch = 0 : i64, scratch_operands = 1 : i64, tpu.core_type = #tpu.core_type<tc>, window_params = [{transform_indices = @transform_0, window_bounds = array<i64: 16, 8>}, {pipeline_mode = #tpu.pipeline_mode<synchronous>, transform_indices = @transform_1, window_bounds = array<i64: 128, 128>}, {pipeline_mode = #tpu.pipeline_mode<synchronous>, transform_indices = @transform_2, window_bounds = array<i64: 128, 128>}, {pipeline_mode = #tpu.pipeline_mode<synchronous>, transform_indices = @transform_3, window_bounds = array<i64: 128, 128>}, {pipeline_mode = #tpu.pipeline_mode<synchronous>, transform_indices = @transform_4, window_bounds = array<i64: 128, 128>}, {pipeline_mode = #tpu.pipeline_mode<synchronous>, transform_indices = @transform_5, window_bounds = array<i64: 4, 128>}, {transform_indices = @transform_6, window_bounds = array<i64: 16, 128>}]} {
    %cst = arith.constant 0.000000e+00 : bf16
    %0 = vector.broadcast %cst : bf16 to vector<16x128xbf16>
    %c0 = arith.constant 0 : index
    %c0_0 = arith.constant 0 : index
    %1 = vector.load %arg8[%c0, %c0_0] : memref<16x128xbf16, #tpu.memory_space<vmem>>, vector<16x128xbf16>
    tpu.vector_store %arg8[%c0, %c0_0], %0 {strides = array<i32>} : memref<16x128xbf16, #tpu.memory_space<vmem>>, vector<16x128xbf16>,
    %c0_1 = arith.constant 0 : index
    %c0_2 = arith.constant 0 : index
    %2 = vector.load %arg1[%c0_1, %c0_2] : memref<16x8xf32, #tpu.memory_space<vmem>>, vector<16x8xf32>
    %3 = arith.truncf %2 : vector<16x8xf32> to vector<16x8xbf16>
    %c0_3 = arith.constant 0 : index
    %c0_4 = arith.constant 0 : index
    %4 = vector.load %arg8[%c0_3, %c0_4] : memref<16x128xbf16, #tpu.memory_space<vmem>>, vector<16x8xbf16>
    tpu.vector_store %arg8[%c0_3, %c0_4], %3 {strides = array<i32>} : memref<16x128xbf16, #tpu.memory_space<vmem>>, vector<16x8xbf16>,
    %c0_5 = arith.constant 0 : index
    %c0_6 = arith.constant 0 : index
    %5 = vector.load %arg8[%c0_5, %c0_6] : memref<16x128xbf16, #tpu.memory_space<vmem>>, vector<16x128xbf16>
    %c0_7 = arith.constant 0 : index
    %c0_8 = arith.constant 0 : index
    %6 = vector.load %arg2[%c0_7, %c0_8] : memref<128x128xbf16, #tpu.memory_space<vmem>>, vector<128x128xbf16>
    %c0_9 = arith.constant 0 : index
    %c0_10 = arith.constant 0 : index
    %7 = vector.load %arg6[%c0_9, %c0_10] : memref<4x128xf32, #tpu.memory_space<vmem>>, vector<1x128xf32>
    %cst_11 = arith.constant dense<0.000000e+00> : vector<16x128xf32>
    %8 = tpu.matmul %5, %6, %cst_11 {dimension_numbers = #tpu.dot_dimension_numbers<[1], [0], [0], [1], [0, 0, 1, 1], [], []>} : vector<16x128xbf16>, vector<128x128xbf16>, vector<16x128xf32> -> vector<16x128xf32>
    %9 = vector.broadcast %7 : vector<1x128xf32> to vector<16x128xf32>
    %10 = arith.addf %8, %9 : vector<16x128xf32>
    %cst_12 = arith.constant 0.000000e+00 : f32
    %11 = vector.broadcast %cst_12 : f32 to vector<16x128xf32>
    %12 = arith.maximumf %10, %11 : vector<16x128xf32>
    %13 = arith.truncf %12 : vector<16x128xf32> to vector<16x128xbf16>
    %c0_13 = arith.constant 0 : index
    %c0_14 = arith.constant 0 : index
    %14 = vector.load %arg3[%c0_13, %c0_14] : memref<128x128xbf16, #tpu.memory_space<vmem>>, vector<128x128xbf16>
    %c1 = arith.constant 1 : index
    %c0_15 = arith.constant 0 : index
    %15 = vector.load %arg6[%c1, %c0_15] : memref<4x128xf32, #tpu.memory_space<vmem>>, vector<1x128xf32>
    %cst_16 = arith.constant dense<0.000000e+00> : vector<16x128xf32>
    %16 = tpu.matmul %13, %14, %cst_16 {dimension_numbers = #tpu.dot_dimension_numbers<[1], [0], [0], [1], [0, 0, 1, 1], [], []>} : vector<16x128xbf16>, vector<128x128xbf16>, vector<16x128xf32> -> vector<16x128xf32>
    %17 = vector.broadcast %15 : vector<1x128xf32> to vector<16x128xf32>
    %18 = arith.addf %16, %17 : vector<16x128xf32>
    %cst_17 = arith.constant 0.000000e+00 : f32
    %19 = vector.broadcast %cst_17 : f32 to vector<16x128xf32>
    %20 = arith.maximumf %18, %19 : vector<16x128xf32>
    %21 = arith.truncf %20 : vector<16x128xf32> to vector<16x128xbf16>
    %c0_18 = arith.constant 0 : index
    %c0_19 = arith.constant 0 : index
    %22 = vector.load %arg4[%c0_18, %c0_19] : memref<128x128xbf16, #tpu.memory_space<vmem>>, vector<128x128xbf16>
    %c2 = arith.constant 2 : index
    %c0_20 = arith.constant 0 : index
    %23 = vector.load %arg6[%c2, %c0_20] : memref<4x128xf32, #tpu.memory_space<vmem>>, vector<1x128xf32>
    %cst_21 = arith.constant dense<0.000000e+00> : vector<16x128xf32>
    %24 = tpu.matmul %21, %22, %cst_21 {dimension_numbers = #tpu.dot_dimension_numbers<[1], [0], [0], [1], [0, 0, 1, 1], [], []>} : vector<16x128xbf16>, vector<128x128xbf16>, vector<16x128xf32> -> vector<16x128xf32>
    %25 = vector.broadcast %23 : vector<1x128xf32> to vector<16x128xf32>
    %26 = arith.addf %24, %25 : vector<16x128xf32>
    %cst_22 = arith.constant 0.000000e+00 : f32
    %27 = vector.broadcast %cst_22 : f32 to vector<16x128xf32>
    %28 = arith.maximumf %26, %27 : vector<16x128xf32>
    %29 = arith.truncf %28 : vector<16x128xf32> to vector<16x128xbf16>
    %c0_23 = arith.constant 0 : index
    %c0_24 = arith.constant 0 : index
    %30 = vector.load %arg5[%c0_23, %c0_24] : memref<128x128xbf16, #tpu.memory_space<vmem>>, vector<128x128xbf16>
    %c3 = arith.constant 3 : index
    %c0_25 = arith.constant 0 : index
    %31 = vector.load %arg6[%c3, %c0_25] : memref<4x128xf32, #tpu.memory_space<vmem>>, vector<1x128xf32>
    %cst_26 = arith.constant dense<0.000000e+00> : vector<16x128xf32>
    %32 = tpu.matmul %29, %30, %cst_26 {dimension_numbers = #tpu.dot_dimension_numbers<[1], [0], [0], [1], [0, 0, 1, 1], [], []>} : vector<16x128xbf16>, vector<128x128xbf16>, vector<16x128xf32> -> vector<16x128xf32>
    %33 = vector.broadcast %31 : vector<1x128xf32> to vector<16x128xf32>
    %34 = arith.addf %32, %33 : vector<16x128xf32>
    %35 = arith.truncf %34 : vector<16x128xf32> to vector<16x128xbf16>
    %c0_27 = arith.constant 0 : index
    %c0_28 = arith.constant 0 : index
    %36 = vector.load %arg7[%c0_27, %c0_28] : memref<16x128xbf16, #tpu.memory_space<vmem>>, vector<16x128xbf16>
    tpu.vector_store %arg7[%c0_27, %c0_28], %35 {strides = array<i32>} : memref<16x128xbf16, #tpu.memory_space<vmem>>, vector<16x128xbf16>,
    return
  }
  func.func @transform_0(%arg0: i32) -> (i32, i32) {
    %c0_i32 = arith.constant 0 : i32
    %c0_i32_0 = arith.constant 0 : i32
    return %arg0, %c0_i32 : i32, i32
  }
  func.func @transform_1(%arg0: i32) -> (i32, i32) {
    %c0_i32 = arith.constant 0 : i32
    %c0_i32_0 = arith.constant 0 : i32
    %c0_i32_1 = arith.constant 0 : i32
    return %c0_i32, %c0_i32_0 : i32, i32
  }
  func.func @transform_2(%arg0: i32) -> (i32, i32) {
    %c0_i32 = arith.constant 0 : i32
    %c0_i32_0 = arith.constant 0 : i32
    %c0_i32_1 = arith.constant 0 : i32
    return %c0_i32, %c0_i32_0 : i32, i32
  }
  func.func @transform_3(%arg0: i32) -> (i32, i32) {
    %c0_i32 = arith.constant 0 : i32
    %c0_i32_0 = arith.constant 0 : i32
    %c0_i32_1 = arith.constant 0 : i32
    return %c0_i32, %c0_i32_0 : i32, i32
  }
  func.func @transform_4(%arg0: i32) -> (i32, i32) {
    %c0_i32 = arith.constant 0 : i32
    %c0_i32_0 = arith.constant 0 : i32
    %c0_i32_1 = arith.constant 0 : i32
    return %c0_i32, %c0_i32_0 : i32, i32
  }
  func.func @transform_5(%arg0: i32) -> (i32, i32) {
    %c0_i32 = arith.constant 0 : i32
    %c0_i32_0 = arith.constant 0 : i32
    %c0_i32_1 = arith.constant 0 : i32
    return %c0_i32, %c0_i32_0 : i32, i32
  }
  func.func @transform_6(%arg0: i32) -> (i32, i32) {
    %c0_i32 = arith.constant 0 : i32
    %c0_i32_0 = arith.constant 0 : i32
    return %arg0, %c0_i32 : i32, i32
  }
}

</mosaic_0001>

<llo_original>
// kernel: tpu_custom_call.1
$region0: #{tpu_custom_call.1}
  #allocation0 [shape = 'u32[]', space=smem, size = 0x4, offset = 0x4, fixed_abs, tag = 'smem constant byte address 0x4 - core index']
  #allocation1 [shape = 'u32[144,128]{1,0:T(1,128)}', space=vmem, size = 0x12000, scoped, tag = 'internal scratch']
  #allocation2 [shape = 'bf16[16,128]{1,0:T(16,128)(2,1)}', space=vmem, size = 0x1000, scoped, tag = 'scratch operand']
  %s0 = inlined_call_operand.vmem [shape: f32[16,8], index: 0, kind: input, shape index: {}]
  %s1 = inlined_call_operand.hbm [shape: bf16[128,128], index: 1, kind: input, shape index: {}]
  %s2 = inlined_call_operand.hbm [shape: bf16[128,128], index: 2, kind: input, shape index: {}]
  %s3 = inlined_call_operand.hbm [shape: bf16[128,128], index: 3, kind: input, shape index: {}]
  %s4 = inlined_call_operand.hbm [shape: bf16[128,128], index: 4, kind: input, shape index: {}]
  %s5 = inlined_call_operand.vmem [shape: f32[4,128], index: 5, kind: input, shape index: {}]
  %s6 = inlined_call_operand.hbm [shape: bf16[16,128], index: 6, kind: output, shape index: {}]
  %s7 = sld [smem:[#allocation0]]
  $region50: #{tpu_custom_call.1} parent=0
    _
  %s9 = ssub.s32 1, %s7
  %s10 = scalar_select 0, %s9, %s7
  $region1: #{tpu_custom_call.1} parent=0
    #allocation3 [shape = 'u8[32768]{0}', space=vmem, size = 0x8000, scoped, tag = 'input window, operand 1, single buffered']
    #allocation4 [shape = 's32[1]{0}', space=sflag, size = 0x4, scoped, tag = 'scoped memory for tpu_custom_call.1']
    #allocation5 [shape = 's32[1]{0}', space=sflag, size = 0x4, scoped, tag = 'scoped memory for tpu_custom_call.1']
    #allocation6 [shape = 'u8[32768]{0}', space=vmem, size = 0x8000, scoped, tag = 'input window, operand 2, single buffered']
    #allocation7 [shape = 's32[1]{0}', space=sflag, size = 0x4, scoped, tag = 'scoped memory for tpu_custom_call.1']
    #allocation8 [shape = 'u8[32768]{0}', space=vmem, size = 0x8000, scoped, tag = 'input window, operand 3, single buffered']
    #allocation9 [shape = 'u8[32768]{0}', space=vmem, size = 0x8000, scoped, tag = 'input window, operand 4, single buffered']
    #allocation10 [shape = 's32[1]{0}', space=sflag, size = 0x4, scoped, tag = 'scoped memory for tpu_custom_call.1']
    #allocation11 [shape = 'u8[4096]{0}', space=vmem, size = 0x1000, scoped, tag = 'output window, operand 0, single buffered']
    %11 = vsyncpa [#allocation4], 0
    %12 = vsyncpa [#allocation7], 0
    %13 = vsyncpa [#allocation10], 0
    %14 = vsyncpa [#allocation5], 0
    // Predicated region
    $region2: #{tpu_custom_call.1} parent=1 // pred_check
      _
    $region3: #{tpu_custom_call.1} parent=1 // pred_check_branch
      %16 = sbr.rel (0) target = $region5
    $region4: #{tpu_custom_call.1} parent=1 // pred_region
      _
    $region5: #{tpu_custom_call.1} parent=1 // pred_fallthru
      _
    // Predicated region
    $region6: #{tpu_custom_call.1} parent=1 // pred_check
      _
    $region7: #{tpu_custom_call.1} parent=1 // pred_check_branch
      %18 = sbr.rel (0) target = $region9
    $region8: #{tpu_custom_call.1} parent=1 // pred_region
      %s20 = ssub.s32 1024, 1024
      %21 = vsyncadd [#allocation4], %s20
      %s22 = sshll.u32 [#allocation3], 4
      %s23 = int_to_ptr.vmem [resolvable:$true] %s22
      %28 = dma.hbm_to_vmem [thread:$0]  %s1, 1024, %s23, [#allocation4], 64, 64, 4
    $region9: #{tpu_custom_call.1} parent=1 // pred_fallthru
      _
    // Predicated region
    $region10: #{tpu_custom_call.1} parent=1 // pred_check
      _
    $region11: #{tpu_custom_call.1} parent=1 // pred_check_branch
      %30 = sbr.rel (0) target = $region13
    $region12: #{tpu_custom_call.1} parent=1 // pred_region
      %s32 = ssub.s32 1024, 1024
      %33 = vsyncadd [#allocation7], %s32
      %s34 = sshll.u32 [#allocation6], 4
      %s35 = int_to_ptr.vmem [resolvable:$true] %s34
      %40 = dma.hbm_to_vmem [thread:$0]  %s2, 1024, %s35, [#allocation7], 64, 64, 4
    $region13: #{tpu_custom_call.1} parent=1 // pred_fallthru
      _
    // Predicated region
    $region14: #{tpu_custom_call.1} parent=1 // pred_check
      _
    $region15: #{tpu_custom_call.1} parent=1 // pred_check_branch
      %42 = sbr.rel (0) target = $region17
    $region16: #{tpu_custom_call.1} parent=1 // pred_region
      %s44 = ssub.s32 1024, 1024
      %45 = vsyncadd [#allocation7], %s44
      %s46 = sshll.u32 [#allocation8], 4
      %s47 = int_to_ptr.vmem [resolvable:$true] %s46
      %52 = dma.hbm_to_vmem [thread:$0]  %s3, 1024, %s47, [#allocation7], 64, 64, 4
    $region17: #{tpu_custom_call.1} parent=1 // pred_fallthru
      _
    // Predicated region
    $region18: #{tpu_custom_call.1} parent=1 // pred_check
      _
    $region19: #{tpu_custom_call.1} parent=1 // pred_check_branch
      %54 = sbr.rel (0) target = $region21
    $region20: #{tpu_custom_call.1} parent=1 // pred_region
      %s56 = ssub.s32 1024, 1024
      %57 = vsyncadd [#allocation10], %s56
      %s58 = sshll.u32 [#allocation9], 4
      %s59 = int_to_ptr.vmem [resolvable:$true] %s58
      %64 = dma.hbm_to_vmem [thread:$0]  %s4, 1024, %s59, [#allocation10], 64, 64, 4
    $region21: #{tpu_custom_call.1} parent=1 // pred_fallthru
      _
    // Predicated region
    $region22: #{tpu_custom_call.1} parent=1 // pred_check
      _
    $region23: #{tpu_custom_call.1} parent=1 // pred_check_branch
      %66 = sbr.rel (0) target = $region25
    $region24: #{tpu_custom_call.1} parent=1 // pred_region
      _
    $region25: #{tpu_custom_call.1} parent=1 // pred_fallthru
      _
    // Predicated region
    $region26: #{tpu_custom_call.1} parent=1 // pred_check
      _
    $region27: #{tpu_custom_call.1} parent=1 // pred_check_branch
      %68 = sbr.rel (0) target = $region29
    $region28: #{tpu_custom_call.1} parent=1 // pred_region
      %69 = dma.done [#allocation4], 1024
    $region29: #{tpu_custom_call.1} parent=1 // pred_fallthru
      _
    // Predicated region
    $region30: #{tpu_custom_call.1} parent=1 // pred_check
      _
    $region31: #{tpu_custom_call.1} parent=1 // pred_check_branch
      %71 = sbr.rel (0) target = $region33
    $region32: #{tpu_custom_call.1} parent=1 // pred_region
      %72 = dma.done [#allocation7], 1024
    $region33: #{tpu_custom_call.1} parent=1 // pred_fallthru
      _
    // Predicated region
    $region34: #{tpu_custom_call.1} parent=1 // pred_check
      _
    $region35: #{tpu_custom_call.1} parent=1 // pred_check_branch
      %74 = sbr.rel (0) target = $region37
    $region36: #{tpu_custom_call.1} parent=1 // pred_region
      %75 = dma.done [#allocation7], 1024
    $region37: #{tpu_custom_call.1} parent=1 // pred_fallthru
      _
    // Predicated region
    $region38: #{tpu_custom_call.1} parent=1 // pred_check
      _
    $region39: #{tpu_custom_call.1} parent=1 // pred_check_branch
      %77 = sbr.rel (0) target = $region41
    $region40: #{tpu_custom_call.1} parent=1 // pred_region
      %78 = dma.done [#allocation10], 1024
    $region41: #{tpu_custom_call.1} parent=1 // pred_fallthru
      _
    %80 = vst [vmem:[#allocation2] sm:$0xff] 0
    %v81 = vld [vmem:[%s0] sm:$0xff]
    %v82 = vld [vmem:[%s0 + $0x8] sm:$0xff]
    %v83 = vpack.c.bf16 %v82, %v81
    %vm84 = vcmask 64512
    %85 = vst.msk [vmem:[#allocation2] sm:$0xff] %vm84, %v83
    %v86 = vld [vmem:[#allocation2] sm:$0xff]
    %v87 = vld [vmem:[#allocation3] sm:$0xf]
    %v88 = vld [vmem:[#allocation3 + $0x4] sm:$0xf]
    %v89 = vld [vmem:[#allocation3 + $0x8] sm:$0xf]
    %v90 = vld [vmem:[#allocation3 + $0xc] sm:$0xf]
    %v91 = vld [vmem:[#allocation3 + $0x10] sm:$0xf]
    %v92 = vld [vmem:[#allocation3 + $0x14] sm:$0xf]
    %v93 = vld [vmem:[#allocation3 + $0x18] sm:$0xf]
    %v94 = vld [vmem:[#allocation3 + $0x1c] sm:$0xf]
    %v95 = vld [vmem:[#allocation3 + $0x20] sm:$0xf]
    %v96 = vld [vmem:[#allocation3 + $0x24] sm:$0xf]
    %v97 = vld [vmem:[#allocation3 + $0x28] sm:$0xf]
    %v98 = vld [vmem:[#allocation3 + $0x2c] sm:$0xf]
    %v99 = vld [vmem:[#allocation3 + $0x30] sm:$0xf]
    %v100 = vld [vmem:[#allocation3 + $0x34] sm:$0xf]
    %v101 = vld [vmem:[#allocation3 + $0x38] sm:$0xf]
    %v102 = vld [vmem:[#allocation3 + $0x3c] sm:$0xf]
    %v103 = vld [vmem:[%s5] sm:$0x1]
    %v104 = vlaneseq
    %v105 = vshrl.u32 %v104, 7
    %v106 = vsub.s32 0, %v105
    %v107 = vrot.slane %v103, %v106
    %v124 = vunpack.c.l.b16 %v87
    %v125 = vunpack.c.l.b16 %v88
    %v126 = vunpack.c.l.b16 %v89
    %v127 = vunpack.c.l.b16 %v90
    %v128 = vunpack.c.l.b16 %v91
    %v129 = vunpack.c.l.b16 %v92
    %v130 = vunpack.c.l.b16 %v93
    %v131 = vunpack.c.l.b16 %v94
    %v132 = vunpack.c.l.b16 %v95
    %v133 = vunpack.c.l.b16 %v96
    %v134 = vunpack.c.l.b16 %v97
    %v135 = vunpack.c.l.b16 %v98
    %v136 = vunpack.c.l.b16 %v99
    %v137 = vunpack.c.l.b16 %v100
    %v138 = vunpack.c.l.b16 %v101
    %v139 = vunpack.c.l.b16 %v102
    %v140 = vpack.c.b16 %v125, %v124
    %v141 = vpack.c.b16 %v127, %v126
    %v142 = vpack.c.b16 %v129, %v128
    %v143 = vpack.c.b16 %v131, %v130
    %v144 = vpack.c.b16 %v133, %v132
    %v145 = vpack.c.b16 %v135, %v134
    %v146 = vpack.c.b16 %v137, %v136
    %v147 = vpack.c.b16 %v139, %v138
    %156 = vmatprep.subr.bf16.mxu0 0
    %157 = vmatpush1.bf16.msra.mxu0 %v140
    %158 = vmatprep.subr.bf16.mxu0 0
    %159 = vmatpush1.bf16.msra.mxu0 %v141
    %160 = vmatprep.subr.bf16.mxu0 0
    %161 = vmatpush1.bf16.msra.mxu0 %v142
    %162 = vmatprep.subr.bf16.mxu0 0
    %163 = vmatpush1.bf16.msra.mxu0 %v143
    %164 = vmatprep.subr.bf16.mxu0 0
    %165 = vmatpush1.bf16.msra.mxu0 %v144
    %166 = vmatprep.subr.bf16.mxu0 0
    %167 = vmatpush1.bf16.msra.mxu0 %v145
    %168 = vmatprep.subr.bf16.mxu0 0
    %169 = vmatpush1.bf16.msra.mxu0 %v146
    %170 = vmatprep.subr.bf16.mxu0 0
    %171 = vmatpush1.bf16.msra.mxu0 %v147
    %172 = vmatprep.subr.bf16.mxu0 0
    %173 = vmatpush1.bf16.msra.mxu0 0
    %174 = vmatprep.subr.bf16.mxu0 0
    %175 = vmatpush1.bf16.msra.mxu0 0
    %176 = vmatprep.subr.bf16.mxu0 0
    %177 = vmatpush1.bf16.msra.mxu0 0
    %178 = vmatprep.subr.bf16.mxu0 0
    %179 = vmatpush1.bf16.msra.mxu0 0
    %180 = vmatprep.subr.bf16.mxu0 0
    %181 = vmatpush1.bf16.msra.mxu0 0
    %182 = vmatprep.subr.bf16.mxu0 0
    %183 = vmatpush1.bf16.msra.mxu0 0
    %184 = vmatprep.subr.bf16.mxu0 0
    %185 = vmatpush1.bf16.msra.mxu0 0
    %186 = vmatprep.subr.bf16.mxu0 0
    %187 = vmatpush1.bf16.msra.mxu0 0
    %188 = vmatprep.mubr.bf16.mxu0 0
    %189 = vmatmul.mubr.bf16.gmra.mrb[0].mxu0 %v86
    %v190 = vpop.f32.mrb[0].mxu0
    %v191 = vadd.f32 %v107, %v190
    %v192 = vpop.f32.mrb[0].mxu0
    %v193 = vpop.f32.mrb[0].mxu0
    %v194 = vadd.f32 %v107, %v193
    %v195 = vpop.f32.mrb[0].mxu0
    %196 = vdwg.mxu0
    %v197 = vmax.f32 %v191, 0.0
    %v198 = vmax.f32 %v194, 0.0
    %v199 = vpack.c.bf16 %v198, %v197
    %v200 = vld [vmem:[#allocation6] sm:$0xf]
    %v201 = vld [vmem:[#allocation6 + $0x4] sm:$0xf]
    %v202 = vld [vmem:[#allocation6 + $0x8] sm:$0xf]
    %v203 = vld [vmem:[#allocation6 + $0xc] sm:$0xf]
    %v204 = vld [vmem:[#allocation6 + $0x10] sm:$0xf]
    %v205 = vld [vmem:[#allocation6 + $0x14] sm:$0xf]
    %v206 = vld [vmem:[#allocation6 + $0x18] sm:$0xf]
    %v207 = vld [vmem:[#allocation6 + $0x1c] sm:$0xf]
    %v208 = vld [vmem:[#allocation6 + $0x20] sm:$0xf]
    %v209 = vld [vmem:[#allocation6 + $0x24] sm:$0xf]
    %v210 = vld [vmem:[#allocation6 + $0x28] sm:$0xf]
    %v211 = vld [vmem:[#allocation6 + $0x2c] sm:$0xf]
    %v212 = vld [vmem:[#allocation6 + $0x30] sm:$0xf]
    %v213 = vld [vmem:[#allocation6 + $0x34] sm:$0xf]
    %v214 = vld [vmem:[#allocation6 + $0x38] sm:$0xf]
    %v215 = vld [vmem:[#allocation6 + $0x3c] sm:$0xf]
    %v216 = vld [vmem:[%s5 + $0x1] sm:$0x1]
    %v217 = vlaneseq
    %v218 = vshrl.u32 %v217, 7
    %v219 = vsub.s32 0, %v218
    %v220 = vrot.slane %v216, %v219
    %v237 = vunpack.c.l.b16 %v200
    %v238 = vunpack.c.l.b16 %v201
    %v239 = vunpack.c.l.b16 %v202
    %v240 = vunpack.c.l.b16 %v203
    %v241 = vunpack.c.l.b16 %v204
    %v242 = vunpack.c.l.b16 %v205
    %v243 = vunpack.c.l.b16 %v206
    %v244 = vunpack.c.l.b16 %v207
    %v245 = vunpack.c.l.b16 %v208
    %v246 = vunpack.c.l.b16 %v209
    %v247 = vunpack.c.l.b16 %v210
    %v248 = vunpack.c.l.b16 %v211
    %v249 = vunpack.c.l.b16 %v212
    %v250 = vunpack.c.l.b16 %v213
    %v251 = vunpack.c.l.b16 %v214
    %v252 = vunpack.c.l.b16 %v215
    %v253 = vpack.c.b16 %v238, %v237
    %v254 = vpack.c.b16 %v240, %v239
    %v255 = vpack.c.b16 %v242, %v241
    %v256 = vpack.c.b16 %v244, %v243
    %v257 = vpack.c.b16 %v246, %v245
    %v258 = vpack.c.b16 %v248, %v247
    %v259 = vpack.c.b16 %v250, %v249
    %v260 = vpack.c.b16 %v252, %v251
    %269 = vmatprep.subr.bf16.mxu0 0
    %270 = vmatpush1.bf16.msra.mxu0 %v253
    %271 = vmatprep.subr.bf16.mxu0 0
    %272 = vmatpush1.bf16.msra.mxu0 %v254
    %273 = vmatprep.subr.bf16.mxu0 0
    %274 = vmatpush1.bf16.msra.mxu0 %v255
    %275 = vmatprep.subr.bf16.mxu0 0
    %276 = vmatpush1.bf16.msra.mxu0 %v256
    %277 = vmatprep.subr.bf16.mxu0 0
    %278 = vmatpush1.bf16.msra.mxu0 %v257
    %279 = vmatprep.subr.bf16.mxu0 0
    %280 = vmatpush1.bf16.msra.mxu0 %v258
    %281 = vmatprep.subr.bf16.mxu0 0
    %282 = vmatpush1.bf16.msra.mxu0 %v259
    %283 = vmatprep.subr.bf16.mxu0 0
    %284 = vmatpush1.bf16.msra.mxu0 %v260
    %285 = vmatprep.subr.bf16.mxu0 0
    %286 = vmatpush1.bf16.msra.mxu0 0
    %287 = vmatprep.subr.bf16.mxu0 0
    %288 = vmatpush1.bf16.msra.mxu0 0
    %289 = vmatprep.subr.bf16.mxu0 0
    %290 = vmatpush1.bf16.msra.mxu0 0
    %291 = vmatprep.subr.bf16.mxu0 0
    %292 = vmatpush1.bf16.msra.mxu0 0
    %293 = vmatprep.subr.bf16.mxu0 0
    %294 = vmatpush1.bf16.msra.mxu0 0
    %295 = vmatprep.subr.bf16.mxu0 0
    %296 = vmatpush1.bf16.msra.mxu0 0
    %297 = vmatprep.subr.bf16.mxu0 0
    %298 = vmatpush1.bf16.msra.mxu0 0
    %299 = vmatprep.subr.bf16.mxu0 0
    %300 = vmatpush1.bf16.msra.mxu0 0
    %301 = vmatprep.mubr.bf16.mxu0 0
    %302 = vmatmul.mubr.bf16.gmra.mrb[0].mxu0 %v199
    %v303 = vpop.f32.mrb[0].mxu0
    %v304 = vadd.f32 %v220, %v303
    %v305 = vpop.f32.mrb[0].mxu0
    %v306 = vpop.f32.mrb[0].mxu0
    %v307 = vadd.f32 %v220, %v306
    %v308 = vpop.f32.mrb[0].mxu0
    %309 = vdwg.mxu0
    %v310 = vmax.f32 %v304, 0.0
    %v311 = vmax.f32 %v307, 0.0
    %v312 = vpack.c.bf16 %v311, %v310
    %v313 = vld [vmem:[#allocation8] sm:$0xf]
    %v314 = vld [vmem:[#allocation8 + $0x4] sm:$0xf]
    %v315 = vld [vmem:[#allocation8 + $0x8] sm:$0xf]
    %v316 = vld [vmem:[#allocation8 + $0xc] sm:$0xf]
    %v317 = vld [vmem:[#allocation8 + $0x10] sm:$0xf]
    %v318 = vld [vmem:[#allocation8 + $0x14] sm:$0xf]
    %v319 = vld [vmem:[#allocation8 + $0x18] sm:$0xf]
    %v320 = vld [vmem:[#allocation8 + $0x1c] sm:$0xf]
    %v321 = vld [vmem:[#allocation8 + $0x20] sm:$0xf]
    %v322 = vld [vmem:[#allocation8 + $0x24] sm:$0xf]
    %v323 = vld [vmem:[#allocation8 + $0x28] sm:$0xf]
    %v324 = vld [vmem:[#allocation8 + $0x2c] sm:$0xf]
    %v325 = vld [vmem:[#allocation8 + $0x30] sm:$0xf]
    %v326 = vld [vmem:[#allocation8 + $0x34] sm:$0xf]
    %v327 = vld [vmem:[#allocation8 + $0x38] sm:$0xf]
    %v328 = vld [vmem:[#allocation8 + $0x3c] sm:$0xf]
    %v329 = vld [vmem:[%s5 + $0x2] sm:$0x1]
    %v330 = vlaneseq
    %v331 = vshrl.u32 %v330, 7
    %v332 = vsub.s32 0, %v331
    %v333 = vrot.slane %v329, %v332
    %v350 = vunpack.c.l.b16 %v313
    %v351 = vunpack.c.l.b16 %v314
    %v352 = vunpack.c.l.b16 %v315
    %v353 = vunpack.c.l.b16 %v316
    %v354 = vunpack.c.l.b16 %v317
    %v355 = vunpack.c.l.b16 %v318
    %v356 = vunpack.c.l.b16 %v319
    %v357 = vunpack.c.l.b16 %v320
    %v358 = vunpack.c.l.b16 %v321
    %v359 = vunpack.c.l.b16 %v322
    %v360 = vunpack.c.l.b16 %v323
    %v361 = vunpack.c.l.b16 %v324
    %v362 = vunpack.c.l.b16 %v325
    %v363 = vunpack.c.l.b16 %v326
    %v364 = vunpack.c.l.b16 %v327
    %v365 = vunpack.c.l.b16 %v328
    %v366 = vpack.c.b16 %v351, %v350
    %v367 = vpack.c.b16 %v353, %v352
    %v368 = vpack.c.b16 %v355, %v354
    %v369 = vpack.c.b16 %v357, %v356
    %v370 = vpack.c.b16 %v359, %v358
    %v371 = vpack.c.b16 %v361, %v360
    %v372 = vpack.c.b16 %v363, %v362
    %v373 = vpack.c.b16 %v365, %v364
    %382 = vmatprep.subr.bf16.mxu0 0
    %383 = vmatpush1.bf16.msra.mxu0 %v366
    %384 = vmatprep.subr.bf16.mxu0 0
    %385 = vmatpush1.bf16.msra.mxu0 %v367
    %386 = vmatprep.subr.bf16.mxu0 0
    %387 = vmatpush1.bf16.msra.mxu0 %v368
    %388 = vmatprep.subr.bf16.mxu0 0
    %389 = vmatpush1.bf16.msra.mxu0 %v369
    %390 = vmatprep.subr.bf16.mxu0 0
    %391 = vmatpush1.bf16.msra.mxu0 %v370
    %392 = vmatprep.subr.bf16.mxu0 0
    %393 = vmatpush1.bf16.msra.mxu0 %v371
    %394 = vmatprep.subr.bf16.mxu0 0
    %395 = vmatpush1.bf16.msra.mxu0 %v372
    %396 = vmatprep.subr.bf16.mxu0 0
    %397 = vmatpush1.bf16.msra.mxu0 %v373
    %398 = vmatprep.subr.bf16.mxu0 0
    %399 = vmatpush1.bf16.msra.mxu0 0
    %400 = vmatprep.subr.bf16.mxu0 0
    %401 = vmatpush1.bf16.msra.mxu0 0
    %402 = vmatprep.subr.bf16.mxu0 0
    %403 = vmatpush1.bf16.msra.mxu0 0
    %404 = vmatprep.subr.bf16.mxu0 0
    %405 = vmatpush1.bf16.msra.mxu0 0
    %406 = vmatprep.subr.bf16.mxu0 0
    %407 = vmatpush1.bf16.msra.mxu0 0
    %408 = vmatprep.subr.bf16.mxu0 0
    %409 = vmatpush1.bf16.msra.mxu0 0
    %410 = vmatprep.subr.bf16.mxu0 0
    %411 = vmatpush1.bf16.msra.mxu0 0
    %412 = vmatprep.subr.bf16.mxu0 0
    %413 = vmatpush1.bf16.msra.mxu0 0
    %414 = vmatprep.mubr.bf16.mxu0 0
    %415 = vmatmul.mubr.bf16.gmra.mrb[0].mxu0 %v312
    %v416 = vpop.f32.mrb[0].mxu0
    %v417 = vadd.f32 %v333, %v416
    %v418 = vpop.f32.mrb[0].mxu0
    %v419 = vpop.f32.mrb[0].mxu0
    %v420 = vadd.f32 %v333, %v419
    %v421 = vpop.f32.mrb[0].mxu0
    %422 = vdwg.mxu0
    %v423 = vmax.f32 %v417, 0.0
    %v424 = vmax.f32 %v420, 0.0
    %v425 = vpack.c.bf16 %v424, %v423
    %v426 = vld [vmem:[#allocation9] sm:$0xf]
    %v427 = vld [vmem:[#allocation9 + $0x4] sm:$0xf]
    %v428 = vld [vmem:[#allocation9 + $0x8] sm:$0xf]
    %v429 = vld [vmem:[#allocation9 + $0xc] sm:$0xf]
    %v430 = vld [vmem:[#allocation9 + $0x10] sm:$0xf]
    %v431 = vld [vmem:[#allocation9 + $0x14] sm:$0xf]
    %v432 = vld [vmem:[#allocation9 + $0x18] sm:$0xf]
    %v433 = vld [vmem:[#allocation9 + $0x1c] sm:$0xf]
    %v434 = vld [vmem:[#allocation9 + $0x20] sm:$0xf]
    %v435 = vld [vmem:[#allocation9 + $0x24] sm:$0xf]
    %v436 = vld [vmem:[#allocation9 + $0x28] sm:$0xf]
    %v437 = vld [vmem:[#allocation9 + $0x2c] sm:$0xf]
    %v438 = vld [vmem:[#allocation9 + $0x30] sm:$0xf]
    %v439 = vld [vmem:[#allocation9 + $0x34] sm:$0xf]
    %v440 = vld [vmem:[#allocation9 + $0x38] sm:$0xf]
    %v441 = vld [vmem:[#allocation9 + $0x3c] sm:$0xf]
    %v442 = vld [vmem:[%s5 + $0x3] sm:$0x1]
    %v443 = vlaneseq
    %v444 = vshrl.u32 %v443, 7
    %v445 = vsub.s32 0, %v444
    %v446 = vrot.slane %v442, %v445
    %v463 = vunpack.c.l.b16 %v426
    %v464 = vunpack.c.l.b16 %v427
    %v465 = vunpack.c.l.b16 %v428
    %v466 = vunpack.c.l.b16 %v429
    %v467 = vunpack.c.l.b16 %v430
    %v468 = vunpack.c.l.b16 %v431
    %v469 = vunpack.c.l.b16 %v432
    %v470 = vunpack.c.l.b16 %v433
    %v471 = vunpack.c.l.b16 %v434
    %v472 = vunpack.c.l.b16 %v435
    %v473 = vunpack.c.l.b16 %v436
    %v474 = vunpack.c.l.b16 %v437
    %v475 = vunpack.c.l.b16 %v438
    %v476 = vunpack.c.l.b16 %v439
    %v477 = vunpack.c.l.b16 %v440
    %v478 = vunpack.c.l.b16 %v441
    %v479 = vpack.c.b16 %v464, %v463
    %v480 = vpack.c.b16 %v466, %v465
    %v481 = vpack.c.b16 %v468, %v467
    %v482 = vpack.c.b16 %v470, %v469
    %v483 = vpack.c.b16 %v472, %v471
    %v484 = vpack.c.b16 %v474, %v473
    %v485 = vpack.c.b16 %v476, %v475
    %v486 = vpack.c.b16 %v478, %v477
    %495 = vmatprep.subr.bf16.mxu0 0
    %496 = vmatpush1.bf16.msra.mxu0 %v479
    %497 = vmatprep.subr.bf16.mxu0 0
    %498 = vmatpush1.bf16.msra.mxu0 %v480
    %499 = vmatprep.subr.bf16.mxu0 0
    %500 = vmatpush1.bf16.msra.mxu0 %v481
    %501 = vmatprep.subr.bf16.mxu0 0
    %502 = vmatpush1.bf16.msra.mxu0 %v482
    %503 = vmatprep.subr.bf16.mxu0 0
    %504 = vmatpush1.bf16.msra.mxu0 %v483
    %505 = vmatprep.subr.bf16.mxu0 0
    %506 = vmatpush1.bf16.msra.mxu0 %v484
    %507 = vmatprep.subr.bf16.mxu0 0
    %508 = vmatpush1.bf16.msra.mxu0 %v485
    %509 = vmatprep.subr.bf16.mxu0 0
    %510 = vmatpush1.bf16.msra.mxu0 %v486
    %511 = vmatprep.subr.bf16.mxu0 0
    %512 = vmatpush1.bf16.msra.mxu0 0
    %513 = vmatprep.subr.bf16.mxu0 0
    %514 = vmatpush1.bf16.msra.mxu0 0
    %515 = vmatprep.subr.bf16.mxu0 0
    %516 = vmatpush1.bf16.msra.mxu0 0
    %517 = vmatprep.subr.bf16.mxu0 0
    %518 = vmatpush1.bf16.msra.mxu0 0
    %519 = vmatprep.subr.bf16.mxu0 0
    %520 = vmatpush1.bf16.msra.mxu0 0
    %521 = vmatprep.subr.bf16.mxu0 0
    %522 = vmatpush1.bf16.msra.mxu0 0
    %523 = vmatprep.subr.bf16.mxu0 0
    %524 = vmatpush1.bf16.msra.mxu0 0
    %525 = vmatprep.subr.bf16.mxu0 0
    %526 = vmatpush1.bf16.msra.mxu0 0
    %527 = vmatprep.mubr.bf16.mxu0 0
    %528 = vmatmul.mubr.bf16.gmra.mrb[0].mxu0 %v425
    %v529 = vpop.f32.mrb[0].mxu0
    %v530 = vadd.f32 %v446, %v529
    %v531 = vpop.f32.mrb[0].mxu0
    %v532 = vpop.f32.mrb[0].mxu0
    %v533 = vadd.f32 %v446, %v532
    %v534 = vpop.f32.mrb[0].mxu0
    %535 = vdwg.mxu0
    %v536 = vpack.c.bf16 %v533, %v530
    %v538 = vunpack.c.l.b16 %v536
    %v539 = vunpack.c.h.b16 %v536
    %v540 = vpack.c.b16 %v538, %v538
    %v541 = vpack.c.b16 %v539, %v539
    %544 = vst [vmem:[#allocation11] sm:$0xf] %v540
    %545 = vst [vmem:[#allocation11 + $0x4] sm:$0xf] %v541
    // Predicated region
    $region42: #{tpu_custom_call.1} parent=1 // pred_check
      _
    $region43: #{tpu_custom_call.1} parent=1 // pred_check_branch
      %547 = sbr.rel (0) target = $region45
    $region44: #{tpu_custom_call.1} parent=1 // pred_region
      %s549 = ssub.s32 128, 128
      %550 = vsyncadd [#allocation5], %s549
      %s551 = sshll.u32 [#allocation11], 4
      %s552 = int_to_ptr.vmem [resolvable:$true] %s551
      %557 = dma.vmem_to_hbm [thread:$0]  %s552, 128, %s6, [#allocation5], 64, 64, 4
    $region45: #{tpu_custom_call.1} parent=1 // pred_fallthru
      _
    // Predicated region
    $region46: #{tpu_custom_call.1} parent=1 // pred_check
      _
    $region47: #{tpu_custom_call.1} parent=1 // pred_check_branch
      %559 = sbr.rel (0) target = $region49
    $region48: #{tpu_custom_call.1} parent=1 // pred_region
      %560 = dma.done [#allocation5], 128
    $region49: #{tpu_custom_call.1} parent=1 // pred_fallthru
      _
    %561 = vsyncpa [#allocation4], 1
    %562 = vsyncpa [#allocation7], 1
    %563 = vsyncpa [#allocation10], 1
    %564 = vsyncpa [#allocation5], 1

</llo_original>
